<compile_context>
chip_gen: v6e
topology: v6e:2x2x1
jax: 0.10.0
libtpu: 0.0.40
codegen_flags: <defaults>
</compile_context>

<pallas_src>
import functools

import jax
import jax.numpy as jnp
from jax.experimental import pallas as pl
from jax.experimental.pallas import tpu as pltpu

_LANE = 128
_SUBLANE = 8


def _tensorcores_per_chip():
    """Best-effort TensorCores-per-chip count.

    Defaults to 1 (correct for v5e/v6e); only a positive detection of a
    multi-TC chip (v7x / megacore parts) enables the 2-way grid split.
    A wrong answer only costs bandwidth, never correctness (all extra steps
    are fully masked)."""
    try:
        info = pltpu.get_tpu_info()
        for name in ("tensorcores_per_chip", "num_tensorcores", "num_cores",
                     "core_count", "cores_per_chip"):
            v = getattr(info, name, None)
            if isinstance(v, int) and v in (1, 2):
                return v
    except Exception:
        pass
    try:
        kind = jax.devices()[0].device_kind.lower()
        if ("7x" in kind) or ("v7" in kind) or ("v4" in kind) or ("v5p" in kind):
            return 2
    except Exception:
        pass
    return 1


def _stream_dtype(dt):
    dt = jnp.dtype(dt)
    if dt in (jnp.dtype(jnp.float32), jnp.dtype(jnp.bfloat16), jnp.dtype(jnp.float16)):
        return dt
    return jnp.dtype(jnp.float32)


def _dice_sums_kernel(x_ref, y_ref, inter_ref, union_ref, *,
                      rows, tile_rows, steps_per_core, num_blocks, needs_mask):
    """Grid: (core, step).  Accumulates lane-shaped (8, 128) partial sums.

    x_ref, y_ref:          (tile_rows, 128) tiles of pred / mask.
    inter_ref, union_ref:  (8, 128) f32 per-core resident output accumulators
                           (same output block for every step of a core).
    """
    c = pl.program_id(0)
    j = pl.program_id(1)

    @pl.when(j == 0)
    def _init():
        inter_ref[...] = jnp.zeros_like(inter_ref)
        union_ref[...] = jnp.zeros_like(union_ref)

    x = x_ref[...].astype(jnp.float32)
    m = y_ref[...].astype(jnp.float32)
    # sigmoid(x) = 0.5 * tanh(0.5 * x) + 0.5  (EUP transcendental + 2 VPU ops).
    p = 0.5 * jnp.tanh(0.5 * x) + 0.5

    folds = tile_rows // _SUBLANE

    def _accumulate(pv, mv):
        inter_ref[...] += jnp.sum((pv * mv).reshape(folds, _SUBLANE, _LANE), axis=0)
        union_ref[...] += jnp.sum((pv + mv).reshape(folds, _SUBLANE, _LANE), axis=0)

    if needs_mask:
        blk = c * steps_per_core + j            # un-clamped block index

        @pl.when(blk >= num_blocks - 1)         # partial last block / fully-OOB steps
        def _edge():
            row0 = blk * tile_rows
            ridx = row0 + jax.lax.broadcasted_iota(jnp.int32, (tile_rows, _LANE), 0)
            valid = ridx < rows
            _accumulate(jnp.where(valid, p, 0.0), jnp.where(valid, m, 0.0))

        @pl.when(blk < num_blocks - 1)          # fully in-bounds steps: no mask work
        def _body():
            _accumulate(p, m)
    else:
        _accumulate(p, m)


def dice_loss(pred, mask, smooth=1.0):
    """JAX/Pallas equivalent of DiceLoss.forward(pred, mask). Returns an f32 scalar."""
    assert pred.shape == mask.shape, "pred and mask should have the same shape."

    x = pred.reshape(-1)
    y = mask.reshape(-1)
    x = x.astype(_stream_dtype(x.dtype))
    y = y.astype(_stream_dtype(y.dtype))
    n = x.shape[0]

    # Sublane granularity of the row tiling (16 covers packed 16-bit layouts).
    sub = 8 if (x.dtype == jnp.dtype(jnp.float32) and
                y.dtype == jnp.dtype(jnp.float32)) else 16
    rows = n // _LANE                      # full 128-wide rows handled by the kernel
    rem = n - rows * _LANE                 # trailing (<128) elements -> pure-JAX tail

    if rows < sub:
        # Too small to tile; pure-JAX fallback (kernel path needs >= one sublane tile).
        pf = jax.nn.sigmoid(x.astype(jnp.float32))
        mf = y.astype(jnp.float32)
        intersection = jnp.sum(pf * mf)
        union = jnp.sum(pf) + jnp.sum(mf)
        return 1.0 - (2.0 * intersection + smooth) / (union + smooth)

    inter_tail = jnp.float32(0.0)
    union_tail = jnp.float32(0.0)
    if rem:
        # Uncommon case (n % 128 != 0): tiny pure-JAX tail; main part needs one slice.
        xt = x[rows * _LANE:].astype(jnp.float32)
        yt = y[rows * _LANE:].astype(jnp.float32)
        pt = jax.nn.sigmoid(xt)
        inter_tail = jnp.sum(pt * yt)
        union_tail = jnp.sum(pt) + jnp.sum(yt)
        x2 = x[: rows * _LANE].reshape(rows, _LANE)
        y2 = y[: rows * _LANE].reshape(rows, _LANE)
    else:
        x2 = x.reshape(rows, _LANE)        # free view: no pad, no copy
        y2 = y.reshape(rows, _LANE)

    num_cores = _tensorcores_per_chip()

    # ~2 MiB input blocks (4096 f32 rows / 8192 16-bit rows); ~4 MiB on
    # multi-TC chips (v7x) where per-step DMA is ~2.5x shorter.
    max_item = max(x2.dtype.itemsize, y2.dtype.itemsize)
    block_bytes = (4 << 20) if num_cores >= 2 else (2 << 20)
    tile_rows = block_bytes // (_LANE * max_item)
    tile_rows = max(sub, min(tile_rows, (rows // sub) * sub))

    num_blocks = pl.cdiv(rows, tile_rows)
    steps_per_core = pl.cdiv(num_blocks, num_cores)
    needs_mask = (num_cores * steps_per_core * tile_rows) != rows

    def in_map(c, j):
        # Clamp so trailing (fully masked) steps never DMA out of bounds.
        return (jnp.minimum(c * steps_per_core + j, num_blocks - 1), 0)

    tile_spec = pl.BlockSpec((tile_rows, _LANE), in_map)
    acc_spec = pl.BlockSpec((None, _SUBLANE, _LANE), lambda c, j: (c, 0, 0))
    acc_shape = jax.ShapeDtypeStruct((num_cores, _SUBLANE, _LANE), jnp.float32)

    kernel = functools.partial(
        _dice_sums_kernel,
        rows=rows, tile_rows=tile_rows, steps_per_core=steps_per_core,
        num_blocks=num_blocks, needs_mask=needs_mask)

    inter_p, union_p = pl.pallas_call(
        kernel,
        out_shape=(acc_shape, acc_shape),
        grid=(num_cores, steps_per_core),
        in_specs=[tile_spec, tile_spec],
        out_specs=(acc_spec, acc_spec),
        compiler_params=pltpu.CompilerParams(
            dimension_semantics=("parallel", "arbitrary"),
            vmem_limit_bytes=32 * 1024 * 1024,
        ),
    )(x2, y2)

    intersection = jnp.sum(inter_p) + inter_tail
    union = jnp.sum(union_p) + union_tail          # == sum(sigmoid(pred)) + sum(mask)
    dice = (2.0 * intersection + smooth) / (union + smooth)
    return 1.0 - dice


def dice_loss_ref(pred, mask, smooth=1.0):
    """Pure-JAX reference matching the PyTorch forward."""
    p = jax.nn.sigmoid(pred.astype(jnp.float32))
    m = mask.astype(jnp.float32)
    intersection = jnp.sum(p * m)
    union = jnp.sum(p) + jnp.sum(m)
    return 1.0 - (2.0 * intersection + smooth) / (union + smooth)


if __name__ == "__main__":
    key = jax.random.PRNGKey(0)
    k1, k2 = jax.random.split(key)

    B, C, H, W = 2, 1, 32, 32                      # pred/mask: [B, 1, H, W]
    pred = jax.random.normal(k1, (B, C, H, W), dtype=jnp.float32)
    mask = (jax.random.uniform(k2, (B, C, H, W)) > 0.5).astype(jnp.float32)

    loss = jax.block_until_ready(dice_loss(pred, mask, smooth=1.0))
    ref = jax.block_until_ready(dice_loss_ref(pred, mask, smooth=1.0))

    assert jnp.allclose(loss, ref, atol=1e-5, rtol=1e-5), (loss, ref)
    print("KERNEL_OK")
</pallas_src>

<mosaic_0001>
module attributes {stable_mosaic.version = 11 : i64} {
  func.func @_dice_sums_kernel(%arg0: i32, %arg1: i32, %arg2: memref<16x128xf32, #tpu.memory_space<vmem>>, %arg3: memref<16x128xf32, #tpu.memory_space<vmem>>, %arg4: memref<1x8x128xf32, #tpu.memory_space<vmem>>, %arg5: memref<1x8x128xf32, #tpu.memory_space<vmem>>) attributes {dimension_semantics = [#tpu.dimension_semantics<parallel>, #tpu.dimension_semantics<arbitrary>], iteration_bounds = array<i64: 1, 1>, scalar_prefetch = 0 : i64, scratch_operands = 0 : i64, tpu.core_type = #tpu.core_type<tc>, window_params = [{transform_indices = @transform_0, window_bounds = array<i64: 16, 128>}, {transform_indices = @transform_1, window_bounds = array<i64: 16, 128>}, {transform_indices = @transform_2, window_bounds = array<i64: 1, 8, 128>}, {transform_indices = @transform_3, window_bounds = array<i64: 1, 8, 128>}]} {
    %c0_i32 = arith.constant 0 : i32
    %0 = arith.cmpi eq, %arg1, %c0_i32 : i32
    %1 = arith.extui %0 : i1 to i32
    %c0_i32_0 = arith.constant 0 : i32
    %2 = arith.cmpi ne, %1, %c0_i32_0 : i32
    scf.if %2 {
      %cst_20 = arith.constant 0.000000e+00 : f32
      %30 = vector.broadcast %cst_20 : f32 to vector<8x128xf32>
      %c0_21 = arith.constant 0 : index
      %c0_22 = arith.constant 0 : index
      %c0_23 = arith.constant 0 : index
      %31 = vector.load %arg4[%c0_21, %c0_22, %c0_23] : memref<1x8x128xf32, #tpu.memory_space<vmem>>, vector<1x8x128xf32>
      %32 = vector.shape_cast %31 : vector<1x8x128xf32> to vector<8x128xf32>
      %33 = vector.shape_cast %30 : vector<8x128xf32> to vector<1x8x128xf32>
      tpu.vector_store %arg4[%c0_21, %c0_22, %c0_23], %33 {strides = array<i32>} : memref<1x8x128xf32, #tpu.memory_space<vmem>>, vector<1x8x128xf32>,
      %cst_24 = arith.constant 0.000000e+00 : f32
      %34 = vector.broadcast %cst_24 : f32 to vector<8x128xf32>
      %c0_25 = arith.constant 0 : index
      %c0_26 = arith.constant 0 : index
      %c0_27 = arith.constant 0 : index
      %35 = vector.load %arg5[%c0_25, %c0_26, %c0_27] : memref<1x8x128xf32, #tpu.memory_space<vmem>>, vector<1x8x128xf32>
      %36 = vector.shape_cast %35 : vector<1x8x128xf32> to vector<8x128xf32>
      %37 = vector.shape_cast %34 : vector<8x128xf32> to vector<1x8x128xf32>
      tpu.vector_store %arg5[%c0_25, %c0_26, %c0_27], %37 {strides = array<i32>} : memref<1x8x128xf32, #tpu.memory_space<vmem>>, vector<1x8x128xf32>,
    } else {
    }
    %c0 = arith.constant 0 : index
    %c0_1 = arith.constant 0 : index
    %3 = vector.load %arg2[%c0, %c0_1] : memref<16x128xf32, #tpu.memory_space<vmem>>, vector<16x128xf32>
    %c0_2 = arith.constant 0 : index
    %c0_3 = arith.constant 0 : index
    %4 = vector.load %arg3[%c0_2, %c0_3] : memref<16x128xf32, #tpu.memory_space<vmem>>, vector<16x128xf32>
    %cst = arith.constant 5.000000e-01 : f32
    %5 = vector.broadcast %cst : f32 to vector<16x128xf32>
    %6 = arith.mulf %5, %3 : vector<16x128xf32>
    %7 = math.tanh %6 : vector<16x128xf32>
    %cst_4 = arith.constant 5.000000e-01 : f32
    %8 = vector.broadcast %cst_4 : f32 to vector<16x128xf32>
    %9 = arith.mulf %8, %7 : vector<16x128xf32>
    %cst_5 = arith.constant 5.000000e-01 : f32
    %10 = vector.broadcast %cst_5 : f32 to vector<16x128xf32>
    %11 = arith.addf %9, %10 : vector<16x128xf32>
    %c0_6 = arith.constant 0 : index
    %c0_7 = arith.constant 0 : index
    %c0_8 = arith.constant 0 : index
    %12 = vector.load %arg4[%c0_6, %c0_7, %c0_8] : memref<1x8x128xf32, #tpu.memory_space<vmem>>, vector<1x8x128xf32>
    %13 = vector.shape_cast %12 : vector<1x8x128xf32> to vector<8x128xf32>
    %14 = arith.mulf %11, %4 : vector<16x128xf32>
    %15 = vector.shape_cast %14 : vector<16x128xf32> to vector<2x8x128xf32>
    %cst_9 = arith.constant dense<0.000000e+00> : vector<8x128xf32>
    %16 = vector.multi_reduction <add>, %15, %cst_9 [0] : vector<2x8x128xf32> to vector<8x128xf32>
    %17 = arith.addf %13, %16 : vector<8x128xf32>
    %c0_10 = arith.constant 0 : index
    %c0_11 = arith.constant 0 : index
    %c0_12 = arith.constant 0 : index
    %18 = vector.load %arg4[%c0_10, %c0_11, %c0_12] : memref<1x8x128xf32, #tpu.memory_space<vmem>>, vector<1x8x128xf32>
    %19 = vector.shape_cast %18 : vector<1x8x128xf32> to vector<8x128xf32>
    %20 = vector.shape_cast %17 : vector<8x128xf32> to vector<1x8x128xf32>
    tpu.vector_store %arg4[%c0_10, %c0_11, %c0_12], %20 {strides = array<i32>} : memref<1x8x128xf32, #tpu.memory_space<vmem>>, vector<1x8x128xf32>,
    %c0_13 = arith.constant 0 : index
    %c0_14 = arith.constant 0 : index
    %c0_15 = arith.constant 0 : index
    %21 = vector.load %arg5[%c0_13, %c0_14, %c0_15] : memref<1x8x128xf32, #tpu.memory_space<vmem>>, vector<1x8x128xf32>
    %22 = vector.shape_cast %21 : vector<1x8x128xf32> to vector<8x128xf32>
    %23 = arith.addf %11, %4 : vector<16x128xf32>
    %24 = vector.shape_cast %23 : vector<16x128xf32> to vector<2x8x128xf32>
    %cst_16 = arith.constant dense<0.000000e+00> : vector<8x128xf32>
    %25 = vector.multi_reduction <add>, %24, %cst_16 [0] : vector<2x8x128xf32> to vector<8x128xf32>
    %26 = arith.addf %22, %25 : vector<8x128xf32>
    %c0_17 = arith.constant 0 : index
    %c0_18 = arith.constant 0 : index
    %c0_19 = arith.constant 0 : index
    %27 = vector.load %arg5[%c0_17, %c0_18, %c0_19] : memref<1x8x128xf32, #tpu.memory_space<vmem>>, vector<1x8x128xf32>
    %28 = vector.shape_cast %27 : vector<1x8x128xf32> to vector<8x128xf32>
    %29 = vector.shape_cast %26 : vector<8x128xf32> to vector<1x8x128xf32>
    tpu.vector_store %arg5[%c0_17, %c0_18, %c0_19], %29 {strides = array<i32>} : memref<1x8x128xf32, #tpu.memory_space<vmem>>, vector<1x8x128xf32>,
    return
  }
  func.func @transform_0(%arg0: i32, %arg1: i32) -> (i32, i32) {
    %c1_i32 = arith.constant 1 : i32
    %0 = arith.muli %arg0, %c1_i32 : i32
    %1 = arith.addi %0, %arg1 : i32
    %c0_i32 = arith.constant 0 : i32
    %2 = arith.minsi %1, %c0_i32 : i32
    %c0_i32_0 = arith.constant 0 : i32
    %c0_i32_1 = arith.constant 0 : i32
    return %2, %c0_i32_0 : i32, i32
  }
  func.func @transform_1(%arg0: i32, %arg1: i32) -> (i32, i32) {
    %c1_i32 = arith.constant 1 : i32
    %0 = arith.muli %arg0, %c1_i32 : i32
    %1 = arith.addi %0, %arg1 : i32
    %c0_i32 = arith.constant 0 : i32
    %2 = arith.minsi %1, %c0_i32 : i32
    %c0_i32_0 = arith.constant 0 : i32
    %c0_i32_1 = arith.constant 0 : i32
    return %2, %c0_i32_0 : i32, i32
  }
  func.func @transform_2(%arg0: i32, %arg1: i32) -> (i32, i32, i32) {
    %c0_i32 = arith.constant 0 : i32
    %c0_i32_0 = arith.constant 0 : i32
    %c0_i32_1 = arith.constant 0 : i32
    return %arg0, %c0_i32, %c0_i32_0 : i32, i32, i32
  }
  func.func @transform_3(%arg0: i32, %arg1: i32) -> (i32, i32, i32) {
    %c0_i32 = arith.constant 0 : i32
    %c0_i32_0 = arith.constant 0 : i32
    %c0_i32_1 = arith.constant 0 : i32
    return %arg0, %c0_i32, %c0_i32_0 : i32, i32, i32
  }
}

</mosaic_0001>

<llo_original>
// kernel: tpu_custom_call.1
$region0: #{tpu_custom_call.1}
  #allocation0 [shape = 'u32[]', space=smem, size = 0x4, offset = 0x4, fixed_abs, tag = 'smem constant byte address 0x4 - core index']
  #allocation1 [shape = 'u32[144,128]{1,0:T(1,128)}', space=vmem, size = 0x12000, scoped, tag = 'internal scratch']
  %s0 = inlined_call_operand.hbm [shape: f32[16,128], index: 0, kind: input, shape index: {}]
  %s1 = inlined_call_operand.hbm [shape: f32[16,128], index: 1, kind: input, shape index: {}]
  %s2 = inlined_call_operand.hbm [shape: f32[1,8,128], index: 2, kind: output, shape index: {0}]
  %s3 = inlined_call_operand.hbm [shape: f32[1,8,128], index: 3, kind: output, shape index: {1}]
  %4 = xla_tuple %s2, %s3
  %s5 = sld [smem:[#allocation0]]
  $region38: #{tpu_custom_call.1} parent=0
    _
  %s7 = ssub.s32 1, %s5
  %s8 = scalar_select 0, %s7, %s5
  $region1: #{tpu_custom_call.1} parent=0
    #allocation2 [shape = 'u8[8192]{0}', space=vmem, size = 0x2000, scoped, tag = 'input window, operand 0, single buffered']
    #allocation3 [shape = 's32[1]{0}', space=sflag, size = 0x4, scoped, tag = 'scoped memory for tpu_custom_call.1']
    #allocation4 [shape = 's32[1]{0}', space=sflag, size = 0x4, scoped, tag = 'scoped memory for tpu_custom_call.1']
    #allocation5 [shape = 'u8[8192]{0}', space=vmem, size = 0x2000, scoped, tag = 'input window, operand 1, single buffered']
    #allocation6 [shape = 's32[1]{0}', space=sflag, size = 0x4, scoped, tag = 'scoped memory for tpu_custom_call.1']
    #allocation7 [shape = 'u8[4096]{0}', space=vmem, size = 0x1000, scoped, tag = 'output window, operand 0, single buffered']
    #allocation8 [shape = 'u8[4096]{0}', space=vmem, size = 0x1000, scoped, tag = 'output window, operand 1, single buffered']
    #allocation9 [shape = 's32[1]{0}', space=sflag, size = 0x4, scoped, tag = 'scoped memory for tpu_custom_call.1']
    %9 = vsyncpa [#allocation3], 0
    %10 = vsyncpa [#allocation6], 0
    %11 = vsyncpa [#allocation4], 0
    %12 = vsyncpa [#allocation9], 0
    // Predicated region
    $region2: #{tpu_custom_call.1} parent=1 // pred_check
      _
    $region3: #{tpu_custom_call.1} parent=1 // pred_check_branch
      %14 = sbr.rel (0) target = $region5
    $region4: #{tpu_custom_call.1} parent=1 // pred_region
      %s15 = sadd.s32 0, 0
      %p16 = scmp.lt.s32.totalorder %s15, 0
      %s17 = scalar_select %p16, %s15, 0
      %s18 = smul.u32 2, %s17
      %s20 = ssub.s32 256, 256
      %21 = vsyncadd [#allocation3], %s20
      %s22 = smul.addr %s18, 128
      %s23 = scalar_lea.hbm %s0, %s22
      %s24 = sshll.u32 [#allocation2], 4
      %s25 = int_to_ptr.vmem [resolvable:$true] %s24
      %30 = dma.hbm_to_vmem [thread:$0]  %s23, 256, %s25, [#allocation3], 128, 128, 8
    $region5: #{tpu_custom_call.1} parent=1 // pred_fallthru
      _
    // Predicated region
    $region6: #{tpu_custom_call.1} parent=1 // pred_check
      _
    $region7: #{tpu_custom_call.1} parent=1 // pred_check_branch
      %32 = sbr.rel (0) target = $region9
    $region8: #{tpu_custom_call.1} parent=1 // pred_region
      %s33 = sadd.s32 0, 0
      %p34 = scmp.lt.s32.totalorder %s33, 0
      %s35 = scalar_select %p34, %s33, 0
      %s36 = smul.u32 2, %s35
      %s38 = ssub.s32 256, 256
      %39 = vsyncadd [#allocation6], %s38
      %s40 = smul.addr %s36, 128
      %s41 = scalar_lea.hbm %s1, %s40
      %s42 = sshll.u32 [#allocation5], 4
      %s43 = int_to_ptr.vmem [resolvable:$true] %s42
      %48 = dma.hbm_to_vmem [thread:$0]  %s41, 256, %s43, [#allocation6], 128, 128, 8
    $region9: #{tpu_custom_call.1} parent=1 // pred_fallthru
      _
    // Predicated region
    $region10: #{tpu_custom_call.1} parent=1 // pred_check
      _
    $region11: #{tpu_custom_call.1} parent=1 // pred_check_branch
      %50 = sbr.rel (0) target = $region13
    $region12: #{tpu_custom_call.1} parent=1 // pred_region
      %51 = dma.done [#allocation3], 256
    $region13: #{tpu_custom_call.1} parent=1 // pred_fallthru
      _
    // Predicated region
    $region14: #{tpu_custom_call.1} parent=1 // pred_check
      _
    $region15: #{tpu_custom_call.1} parent=1 // pred_check_branch
      %53 = sbr.rel (0) target = $region17
    $region16: #{tpu_custom_call.1} parent=1 // pred_region
      %54 = dma.done [#allocation6], 256
    $region17: #{tpu_custom_call.1} parent=1 // pred_fallthru
      _
    %s55 = sadd.s32 0, 0
    %p56 = scmp.lt.s32.totalorder %s55, 0
    %s57 = scalar_select %p56, %s55, 0
    %s58 = smul.u32 2, %s57
    %s59 = sadd.s32 0, 0
    %p60 = scmp.lt.s32.totalorder %s59, 0
    %s61 = scalar_select %p60, %s59, 0
    %s62 = smul.u32 2, %s61
    %p63 = scmp.eq.s32.totalorder 0, 0
    // Predicated region
    $region18: #{tpu_custom_call.1} parent=1 // pred_check
      %p64 = pneg %p63
    $region19: #{tpu_custom_call.1} parent=1 // pred_check_branch
      %66 = sbr.rel (%p64) target = $region21
    $region20: #{tpu_custom_call.1} parent=1 // pred_region
      %67 = vst [vmem:[#allocation7] sm:$0xff] 0.0
      %68 = vst [vmem:[#allocation8] sm:$0xff] 0.0
    $region21: #{tpu_custom_call.1} parent=1 // pred_fallthru
      _
    %v69 = vld [vmem:[#allocation2] sm:$0xff]
    %v70 = vld [vmem:[#allocation2 + $0x8] sm:$0xff]
    %v71 = vld [vmem:[#allocation5] sm:$0xff]
    %v72 = vld [vmem:[#allocation5 + $0x8] sm:$0xff]
    %v73 = vmul.f32 %v69, 0.5
    %v74 = vmul.f32 %v70, 0.5
    %v75 = vtanh.pop %v73
    %v76 = vtanh.pop %v74
    %v77 = vmul.f32 %v75, 0.5
    %v78 = vmul.f32 %v76, 0.5
    %v79 = vadd.f32 %v77, 0.5
    %v80 = vadd.f32 %v78, 0.5
    %v81 = vld [vmem:[#allocation7] sm:$0xff]
    %v82 = vmul.f32 %v79, %v71
    %v83 = vmul.f32 %v80, %v72
    %v84 = vadd.f32 %v82, %v83
    %v85 = vadd.f32 %v81, %v84
    %86 = vst [vmem:[#allocation7] sm:$0xff] %v85
    %v87 = vld [vmem:[#allocation8] sm:$0xff]
    %v88 = vadd.f32 %v79, %v71
    %v89 = vadd.f32 %v80, %v72
    %v90 = vadd.f32 %v88, %v89
    %v91 = vadd.f32 %v87, %v90
    %92 = vst [vmem:[#allocation8] sm:$0xff] %v91
    // Predicated region
    $region22: #{tpu_custom_call.1} parent=1 // pred_check
      _
    $region23: #{tpu_custom_call.1} parent=1 // pred_check_branch
      %94 = sbr.rel (0) target = $region25
    $region24: #{tpu_custom_call.1} parent=1 // pred_region
      %s96 = ssub.s32 128, 128
      %97 = vsyncadd [#allocation4], %s96
      %s99 = sshll.u32 [#allocation7], 4
      %s100 = int_to_ptr.vmem [resolvable:$true] %s99
      %102 = dma.vmem_to_hbm [thread:$0]  %s100, 128, %s2, [#allocation4]
    $region25: #{tpu_custom_call.1} parent=1 // pred_fallthru
      _
    // Predicated region
    $region26: #{tpu_custom_call.1} parent=1 // pred_check
      _
    $region27: #{tpu_custom_call.1} parent=1 // pred_check_branch
      %104 = sbr.rel (0) target = $region29
    $region28: #{tpu_custom_call.1} parent=1 // pred_region
      %s106 = ssub.s32 128, 128
      %107 = vsyncadd [#allocation9], %s106
      %s109 = sshll.u32 [#allocation8], 4
      %s110 = int_to_ptr.vmem [resolvable:$true] %s109
      %112 = dma.vmem_to_hbm [thread:$0]  %s110, 128, %s3, [#allocation9]
    $region29: #{tpu_custom_call.1} parent=1 // pred_fallthru
      _
    // Predicated region
    $region30: #{tpu_custom_call.1} parent=1 // pred_check
      _
    $region31: #{tpu_custom_call.1} parent=1 // pred_check_branch
      %114 = sbr.rel (0) target = $region33
    $region32: #{tpu_custom_call.1} parent=1 // pred_region
      %115 = dma.done [#allocation4], 128
    $region33: #{tpu_custom_call.1} parent=1 // pred_fallthru
      _
    // Predicated region
    $region34: #{tpu_custom_call.1} parent=1 // pred_check
      _
    $region35: #{tpu_custom_call.1} parent=1 // pred_check_branch
      %117 = sbr.rel (0) target = $region37
    $region36: #{tpu_custom_call.1} parent=1 // pred_region
      %118 = dma.done [#allocation9], 128
    $region37: #{tpu_custom_call.1} parent=1 // pred_fallthru
      _
    %119 = vsyncpa [#allocation3], 1
    %120 = vsyncpa [#allocation6], 1
    %121 = vsyncpa [#allocation4], 1
    %122 = vsyncpa [#allocation9], 1

</llo_original>
